<compile_context>
chip_gen: v7x
topology: tpu7x:2x2x1
jax: 0.10.0
libtpu: 0.0.40
codegen_flags: <defaults>
</compile_context>

<pallas_src>
import functools

import jax
import jax.numpy as jnp
from jax import lax
from jax.experimental import pallas as pl
from jax.experimental.pallas import tpu as pltpu

_LANE = 128
_MAX_UNROLL_CHUNKS = 8
_WIDE_ACC_BYTES = 64 * 1024     # vreg-budget gate for the deferred lane reduce
_BCAST_HOIST_BYTES = 64 * 1024  # vreg-budget gate for hoisting the scale broadcast


def _vmem_budgets():
    """Generation-aware (scoped VMEM limit, slab budget) in bytes."""
    vmem_cap = 64 * 1024 * 1024
    try:
        info = pltpu.get_tpu_info()
        vmem_cap = int(getattr(info, "vmem_capacity_bytes", vmem_cap))
    except Exception:
        pass
    if vmem_cap >= 128 * 1024 * 1024:
        # v5e / v6e: 128 MiB physical VMEM.
        return 110 * 1024 * 1024, 92 * 1024 * 1024
    # v7x: 64 MiB physical per TensorCore — leave headroom for compiler scratch.
    return 56 * 1024 * 1024, 42 * 1024 * 1024


def _excite(pooled, w1t_ref, b1_ref, w2t_ref, b2_ref):
    """pooled: (Bblk, C) f32 -> per-channel sigmoid gate (Bblk, C) f32 (MXU)."""
    w1t = w1t_ref[...].astype(jnp.float32)   # (C, Cr)
    w2t = w2t_ref[...].astype(jnp.float32)   # (Cr, C)
    b1 = b1_ref[...].astype(jnp.float32)     # (1, Cr)
    b2 = b2_ref[...].astype(jnp.float32)     # (1, C)
    h = jnp.maximum(jnp.dot(pooled, w1t, preferred_element_type=jnp.float32) + b1, 0.0)
    s = jnp.dot(h, w2t, preferred_element_type=jnp.float32) + b2
    return jax.nn.sigmoid(s)


def _se_fused_kernel(x_ref, w1_ref, b1_ref, w2_ref, b2_ref, o_ref, *,
                     hw, chunk, n_full, tail, wide_acc, hoist_bcast):
    bblk, c, _ = x_ref.shape
    unrolled = n_full <= _MAX_UNROLL_CHUNKS

    # ---- Squeeze: chunked global-average pool over the lane (spatial) axis ----
    # f32 accumulation. When the wide accumulator fits in vregs, the streaming
    # loop is pure VPU adds and a single XLU lane reduce runs after the loop.
    acc_shape = (bblk, c, chunk) if wide_acc else (bblk, c)

    def _accum(acc, xc):
        return acc + xc if wide_acc else acc + jnp.sum(xc, axis=-1)

    acc0 = jnp.zeros(acc_shape, jnp.float32)
    if unrolled:
        acc = acc0
        for ci in range(n_full):
            xc = x_ref[:, :, pl.ds(ci * chunk, chunk)].astype(jnp.float32)
            acc = _accum(acc, xc)
    else:
        def pool_body(i, acc):
            start = pl.multiple_of(i * chunk, chunk)
            xc = x_ref[:, :, pl.ds(start, chunk)].astype(jnp.float32)
            return _accum(acc, xc)
        acc = lax.fori_loop(0, n_full, pool_body, acc0)

    pooled = jnp.sum(acc, axis=-1) if wide_acc else acc
    if tail:
        ts = n_full * chunk
        pooled = pooled + jnp.sum(
            x_ref[:, :, pl.ds(ts, tail)].astype(jnp.float32), axis=-1)
    pooled = pooled * (1.0 / hw)

    # ---- Excitation: FC -> ReLU -> FC -> sigmoid, batched over bblk (MXU) ----
    scale = _excite(pooled, w1_ref, b1_ref, w2_ref, b2_ref)
    scale = scale.astype(o_ref.dtype)[:, :, None]          # (bblk, C, 1), native dtype

    # ---- Scale: native-dtype chunked broadcast multiply, lane-dense stores ----
    if hoist_bcast and n_full >= 2:
        scale_b = jnp.broadcast_to(scale, (bblk, c, chunk))  # hoisted out of the loop
    else:
        scale_b = scale

    if unrolled:
        for ci in range(n_full):
            start = ci * chunk
            o_ref[:, :, pl.ds(start, chunk)] = x_ref[:, :, pl.ds(start, chunk)] * scale_b
    else:
        @pl.loop(0, n_full)
        def _(i):
            start = pl.multiple_of(i * chunk, chunk)
            o_ref[:, :, pl.ds(start, chunk)] = x_ref[:, :, pl.ds(start, chunk)] * scale_b

    if tail:
        ts = n_full * chunk
        o_ref[:, :, pl.ds(ts, tail)] = x_ref[:, :, pl.ds(ts, tail)] * scale


def _se_pool_kernel(x_ref, w1_ref, b1_ref, w2_ref, b2_ref, scale_ref, acc_ref, *,
                    true_hw):
    # Two-pass fallback, pass 1: accumulate pooled sums over HW tiles, emit the
    # (1, C, 1) gate at the final tile.
    h_idx = pl.program_id(1)

    @pl.when(h_idx == 0)
    def _():
        acc_ref[...] = jnp.zeros_like(acc_ref)

    acc_ref[...] += jnp.sum(x_ref[...].astype(jnp.float32), axis=-1)

    @pl.when(h_idx == pl.num_programs(1) - 1)
    def _():
        pooled = acc_ref[...] * (1.0 / true_hw)                       # (1, C)
        gate = _excite(pooled, w1_ref, b1_ref, w2_ref, b2_ref)
        scale_ref[...] = gate[:, :, None]                             # (1, C, 1) f32


def _se_scale_kernel(x_ref, scale_ref, o_ref):
    # Two-pass fallback, pass 2: lane-dense tiled broadcast-multiply (native dtype).
    o_ref[...] = x_ref[...] * scale_ref[...].astype(o_ref.dtype)


def se_block_2d(x, w1, b1, w2, b2):
    """x: (B, C, H, W). w1: (Cr, C), b1: (Cr,), w2: (C, Cr), b2: (C,)."""
    B, C, H, W = x.shape
    Cr = w1.shape[0]
    HW = H * W
    itemsize = x.dtype.itemsize
    out_dtype = x.dtype

    vmem_limit, slab_budget = _vmem_budgets()

    x_flat = x.reshape(B, C, HW)          # no host-side padding on the fused path
    b1_2d = b1.reshape(1, Cr)
    b2_2d = b2.reshape(1, C)
    w1_t = w1.T                           # (C, Cr) — tiny host transpose
    w2_t = w2.T                           # (Cr, C)

    # Count the double-buffered weight/bias blocks against the slab budget.
    param_bytes = (w1_t.size * w1_t.dtype.itemsize + w2_t.size * w2_t.dtype.itemsize
                   + b1_2d.size * b1_2d.dtype.itemsize + b2_2d.size * b2_2d.dtype.itemsize)
    # TODO(synk): for extremely large C/Cr the weight buffers alone can exceed the
    # budget — would need K-tiled excitation; unchanged failure mode from before.
    avail = max(slab_budget - 2 * param_bytes, 1 * 1024 * 1024)

    per_batch = 4 * C * HW * itemsize     # 2x input + 2x output double-buffered slabs

    cost = pl.CostEstimate(
        flops=3 * B * C * HW + 4 * B * C * Cr,
        transcendentals=B * (C + Cr),
        bytes_accessed=2 * B * C * HW * itemsize + param_bytes,
    )

    if per_batch <= avail:
        # ---------------- fused single-pass path (x read from HBM once) ----------
        bblk_cap = max(1, min(B, avail // per_batch))
        # Prefer an even number of >=4 grid steps (2+ per v7x TensorCore), then an
        # even >=2, then >=2; ties go to the biggest batch block (fewer steps).
        best = None
        for d in range(1, B + 1):
            if B % d or d > bblk_cap:
                continue
            steps = B // d
            if steps >= 4 and steps % 2 == 0:
                tier = 0
            elif steps >= 2 and steps % 2 == 0:
                tier = 1
            elif steps >= 2:
                tier = 2
            else:
                tier = 3
            key = (tier, -d)
            if best is None or key < best[0]:
                best = (key, d)
        bblk = best[1]
        # TODO(synk): allow a ragged final batch block (pl.cdiv grid) so prime B
        # with small slabs does not collapse to bblk=1.

        if HW <= 512:
            chunk, n_full, tail = HW, 1, 0
        else:
            chunk = 512
            n_full, tail = divmod(HW, chunk)

        wide_acc = bblk * C * chunk * 4 <= _WIDE_ACC_BYTES
        hoist_bcast = bblk * C * chunk * itemsize <= _BCAST_HOIST_BYTES

        kernel = functools.partial(
            _se_fused_kernel, hw=float(HW), chunk=chunk, n_full=n_full, tail=tail,
            wide_acc=wide_acc, hoist_bcast=hoist_bcast)

        out_flat = pl.pallas_call(
            kernel,
            out_shape=jax.ShapeDtypeStruct((B, C, HW), out_dtype),
            grid_spec=pltpu.PrefetchScalarGridSpec(
                num_scalar_prefetch=0,
                grid=(B // bblk,),
                in_specs=[
                    pl.BlockSpec((bblk, C, HW), lambda b: (b, 0, 0)),   # x slab
                    pl.BlockSpec((C, Cr), lambda b: (0, 0)),            # w1^T
                    pl.BlockSpec((1, Cr), lambda b: (0, 0)),            # b1
                    pl.BlockSpec((Cr, C), lambda b: (0, 0)),            # w2^T
                    pl.BlockSpec((1, C), lambda b: (0, 0)),             # b2
                ],
                out_specs=pl.BlockSpec((bblk, C, HW), lambda b: (b, 0, 0)),
            ),
            compiler_params=pltpu.CompilerParams(
                dimension_semantics=("parallel",),
                vmem_limit_bytes=vmem_limit,
            ),
            cost_estimate=cost,
        )(x_flat, w1_t, b1_2d, w2_t, b2_2d)
        return out_flat.reshape(B, C, H, W)

    # ---------------- two-pass fallback (single-batch slab exceeds VMEM) ----------
    # Padding is only needed here, where the HW tiling requires 128-divisible blocks.
    HWp = ((HW + _LANE - 1) // _LANE) * _LANE
    x_pad = x_flat
    if HWp != HW:
        x_pad = jnp.pad(x_flat, ((0, 0), (0, 0), (0, HWp - HW)))

    def _pick_tile(buffers):
        # Largest lane-multiple tile dividing HWp with `buffers` (C, tile) copies
        # inside the budget.
        max_tile = max(_LANE, (avail // (buffers * C * itemsize)) // _LANE * _LANE)
        tile = min(HWp, max_tile)
        while HWp % tile:
            tile -= _LANE
        return tile
    # TODO(synk): also tile C when C * 128 * itemsize alone exceeds the budget.

    hw_tile_pool = _pick_tile(2)    # pool pass: only x is double-buffered
    hw_tile_scale = _pick_tile(4)   # scale pass: x + out double-buffered

    pool_kernel = functools.partial(_se_pool_kernel, true_hw=float(HW))
    scale = pl.pallas_call(
        pool_kernel,
        out_shape=jax.ShapeDtypeStruct((B, C, 1), jnp.float32),
        grid_spec=pltpu.PrefetchScalarGridSpec(
            num_scalar_prefetch=0,
            grid=(B, HWp // hw_tile_pool),                 # reduction (HW) axis last
            in_specs=[
                pl.BlockSpec((1, C, hw_tile_pool), lambda b, h: (b, 0, h)),
                pl.BlockSpec((C, Cr), lambda b, h: (0, 0)),
                pl.BlockSpec((1, Cr), lambda b, h: (0, 0)),
                pl.BlockSpec((Cr, C), lambda b, h: (0, 0)),
                pl.BlockSpec((1, C), lambda b, h: (0, 0)),
            ],
            out_specs=pl.BlockSpec((1, C, 1), lambda b, h: (b, 0, 0)),
            scratch_shapes=[pltpu.VMEM((1, C), jnp.float32)],
        ),
        compiler_params=pltpu.CompilerParams(
            dimension_semantics=("parallel", "arbitrary"),
            vmem_limit_bytes=vmem_limit,
        ),
    )(x_pad, w1_t, b1_2d, w2_t, b2_2d)

    out_pad = pl.pallas_call(
        _se_scale_kernel,
        out_shape=jax.ShapeDtypeStruct((B, C, HWp), out_dtype),
        grid_spec=pltpu.PrefetchScalarGridSpec(
            num_scalar_prefetch=0,
            grid=(B, HWp // hw_tile_scale),
            in_specs=[
                pl.BlockSpec((1, C, hw_tile_scale), lambda b, h: (b, 0, h)),
                pl.BlockSpec((1, C, 1), lambda b, h: (b, 0, 0)),
            ],
            out_specs=pl.BlockSpec((1, C, hw_tile_scale), lambda b, h: (b, 0, h)),
        ),
        compiler_params=pltpu.CompilerParams(
            dimension_semantics=("parallel", "parallel"),
            vmem_limit_bytes=vmem_limit,
        ),
        cost_estimate=cost,
    )(x_pad, scale)

    out_flat = out_pad[:, :, :HW] if HWp != HW else out_pad
    return out_flat.reshape(B, C, H, W)


if __name__ == "__main__":
    # Small deterministic example consistent with the module: channels=8, reduction=4.
    B, C, H, W = 2, 8, 16, 16
    reduction = 4
    Cr = C // reduction

    key = jax.random.PRNGKey(0)
    kx, k1, k2, k3, k4 = jax.random.split(key, 5)

    x = jax.random.normal(kx, (B, C, H, W), dtype=jnp.float32)
    # Deterministic 1x1-conv parameters; Conv2d(C, Cr, 1) weight -> (Cr, C).
    w1 = jax.random.normal(k1, (Cr, C), dtype=jnp.float32) * 0.1
    b1 = jax.random.normal(k2, (Cr,), dtype=jnp.float32) * 0.1
    w2 = jax.random.normal(k3, (C, Cr), dtype=jnp.float32) * 0.1
    b2 = jax.random.normal(k4, (C,), dtype=jnp.float32) * 0.1

    out = se_block_2d(x, w1, b1, w2, b2)
    jax.block_until_ready(out)

    # Pure-JAX reference for sanity check.
    pooled = jnp.mean(x, axis=(2, 3))                         # (B, C)
    h = jnp.maximum(pooled @ w1.T + b1, 0.0)                  # (B, Cr)
    scale = jax.nn.sigmoid(h @ w2.T + b2)                     # (B, C)
    ref = x * scale[:, :, None, None]
    assert jnp.allclose(out, ref, atol=1e-5, rtol=1e-5), "mismatch vs reference"

    print("KERNEL_OK")
</pallas_src>

<mosaic_0001>
module attributes {stable_mosaic.version = 11 : i64} {
  func.func @_se_fused_kernel(%arg0: i32, %arg1: memref<1x8x256xf32, #tpu.memory_space<vmem>>, %arg2: memref<8x2xf32, #tpu.memory_space<vmem>>, %arg3: memref<1x2xf32, #tpu.memory_space<vmem>>, %arg4: memref<2x8xf32, #tpu.memory_space<vmem>>, %arg5: memref<1x8xf32, #tpu.memory_space<vmem>>, %arg6: memref<1x8x256xf32, #tpu.memory_space<vmem>>) attributes {dimension_semantics = [#tpu.dimension_semantics<parallel>], iteration_bounds = array<i64: 2>, scalar_prefetch = 0 : i64, scratch_operands = 0 : i64, tpu.core_type = #tpu.core_type<tc>, window_params = [{transform_indices = @transform_0, window_bounds = array<i64: 1, 8, 256>}, {pipeline_mode = #tpu.pipeline_mode<synchronous>, transform_indices = @transform_1, window_bounds = array<i64: 8, 2>}, {pipeline_mode = #tpu.pipeline_mode<synchronous>, transform_indices = @transform_2, window_bounds = array<i64: 1, 2>}, {pipeline_mode = #tpu.pipeline_mode<synchronous>, transform_indices = @transform_3, window_bounds = array<i64: 2, 8>}, {pipeline_mode = #tpu.pipeline_mode<synchronous>, transform_indices = @transform_4, window_bounds = array<i64: 1, 8>}, {transform_indices = @transform_5, window_bounds = array<i64: 1, 8, 256>}]} {
    %cst = arith.constant 0.000000e+00 : f32
    %0 = vector.broadcast %cst : f32 to vector<1x8x256xf32>
    %c0 = arith.constant 0 : index
    %c0_0 = arith.constant 0 : index
    %c0_1 = arith.constant 0 : index
    %1 = vector.load %arg1[%c0, %c0_0, %c0_1] : memref<1x8x256xf32, #tpu.memory_space<vmem>>, vector<1x8x256xf32>
    %2 = arith.addf %0, %1 : vector<1x8x256xf32>
    %cst_2 = arith.constant dense<0.000000e+00> : vector<1x8xf32>
    %3 = vector.multi_reduction <add>, %2, %cst_2 [2] : vector<1x8x256xf32> to vector<1x8xf32>
    %cst_3 = arith.constant 3.906250e-03 : f32
    %4 = vector.broadcast %cst_3 : f32 to vector<1x8xf32>
    %5 = arith.mulf %3, %4 : vector<1x8xf32>
    %c0_4 = arith.constant 0 : index
    %c0_5 = arith.constant 0 : index
    %6 = vector.load %arg2[%c0_4, %c0_5] : memref<8x2xf32, #tpu.memory_space<vmem>>, vector<8x2xf32>
    %c0_6 = arith.constant 0 : index
    %c0_7 = arith.constant 0 : index
    %7 = vector.load %arg4[%c0_6, %c0_7] : memref<2x8xf32, #tpu.memory_space<vmem>>, vector<2x8xf32>
    %c0_8 = arith.constant 0 : index
    %c0_9 = arith.constant 0 : index
    %8 = vector.load %arg3[%c0_8, %c0_9] : memref<1x2xf32, #tpu.memory_space<vmem>>, vector<1x2xf32>
    %c0_10 = arith.constant 0 : index
    %c0_11 = arith.constant 0 : index
    %9 = vector.load %arg5[%c0_10, %c0_11] : memref<1x8xf32, #tpu.memory_space<vmem>>, vector<1x8xf32>
    %cst_12 = arith.constant dense<0.000000e+00> : vector<1x2xf32>
    %10 = tpu.matmul %5, %6, %cst_12 {dimension_numbers = #tpu.dot_dimension_numbers<[1], [0], [0], [1], [0, 0, 1, 1], [], []>} : vector<1x8xf32>, vector<8x2xf32>, vector<1x2xf32> -> vector<1x2xf32>
    %11 = arith.addf %10, %8 : vector<1x2xf32>
    %cst_13 = arith.constant 0.000000e+00 : f32
    %12 = vector.broadcast %cst_13 : f32 to vector<1x2xf32>
    %13 = arith.maximumf %11, %12 : vector<1x2xf32>
    %cst_14 = arith.constant dense<0.000000e+00> : vector<1x8xf32>
    %14 = tpu.matmul %13, %7, %cst_14 {dimension_numbers = #tpu.dot_dimension_numbers<[1], [0], [0], [1], [0, 0, 1, 1], [], []>} : vector<1x2xf32>, vector<2x8xf32>, vector<1x8xf32> -> vector<1x8xf32>
    %15 = arith.addf %14, %9 : vector<1x8xf32>
    %16 = arith.negf %15 : vector<1x8xf32>
    %17 = math.exp %16 : vector<1x8xf32>
    %cst_15 = arith.constant 1.000000e+00 : f32
    %18 = vector.broadcast %cst_15 : f32 to vector<1x8xf32>
    %19 = arith.addf %18, %17 : vector<1x8xf32>
    %20 = arith.divf %18, %19 : vector<1x8xf32>
    %21 = vector.shape_cast %20 : vector<1x8xf32> to vector<1x8x1xf32>
    %c0_16 = arith.constant 0 : index
    %c0_17 = arith.constant 0 : index
    %c0_18 = arith.constant 0 : index
    %22 = vector.load %arg1[%c0_16, %c0_17, %c0_18] : memref<1x8x256xf32, #tpu.memory_space<vmem>>, vector<1x8x256xf32>
    %23 = vector.broadcast %21 : vector<1x8x1xf32> to vector<1x8x256xf32>
    %24 = arith.mulf %22, %23 : vector<1x8x256xf32>
    %c0_19 = arith.constant 0 : index
    %c0_20 = arith.constant 0 : index
    %c0_21 = arith.constant 0 : index
    %25 = vector.load %arg6[%c0_19, %c0_20, %c0_21] : memref<1x8x256xf32, #tpu.memory_space<vmem>>, vector<1x8x256xf32>
    tpu.vector_store %arg6[%c0_19, %c0_20, %c0_21], %24 {strides = array<i32>} : memref<1x8x256xf32, #tpu.memory_space<vmem>>, vector<1x8x256xf32>,
    return
  }
  func.func @transform_0(%arg0: i32) -> (i32, i32, i32) {
    %c0_i32 = arith.constant 0 : i32
    %c0_i32_0 = arith.constant 0 : i32
    %c0_i32_1 = arith.constant 0 : i32
    return %arg0, %c0_i32, %c0_i32_0 : i32, i32, i32
  }
  func.func @transform_1(%arg0: i32) -> (i32, i32) {
    %c0_i32 = arith.constant 0 : i32
    %c0_i32_0 = arith.constant 0 : i32
    %c0_i32_1 = arith.constant 0 : i32
    return %c0_i32, %c0_i32_0 : i32, i32
  }
  func.func @transform_2(%arg0: i32) -> (i32, i32) {
    %c0_i32 = arith.constant 0 : i32
    %c0_i32_0 = arith.constant 0 : i32
    %c0_i32_1 = arith.constant 0 : i32
    return %c0_i32, %c0_i32_0 : i32, i32
  }
  func.func @transform_3(%arg0: i32) -> (i32, i32) {
    %c0_i32 = arith.constant 0 : i32
    %c0_i32_0 = arith.constant 0 : i32
    %c0_i32_1 = arith.constant 0 : i32
    return %c0_i32, %c0_i32_0 : i32, i32
  }
  func.func @transform_4(%arg0: i32) -> (i32, i32) {
    %c0_i32 = arith.constant 0 : i32
    %c0_i32_0 = arith.constant 0 : i32
    %c0_i32_1 = arith.constant 0 : i32
    return %c0_i32, %c0_i32_0 : i32, i32
  }
  func.func @transform_5(%arg0: i32) -> (i32, i32, i32) {
    %c0_i32 = arith.constant 0 : i32
    %c0_i32_0 = arith.constant 0 : i32
    %c0_i32_1 = arith.constant 0 : i32
    return %arg0, %c0_i32, %c0_i32_0 : i32, i32, i32
  }
}

</mosaic_0001>

<llo_original>
// kernel: tpu_custom_call.1
$region0: #{tpu_custom_call.1}
  #allocation0 [shape = 'u32[]', space=smem, size = 0x4, offset = 0x4, fixed_abs, tag = 'smem constant byte address 0x4 - core index']
  #allocation1 [shape = 'u32[144,128]{1,0:T(1,128)}', space=vmem, size = 0x12000, scoped, tag = 'internal scratch']
  %s0 = inlined_call_operand.hbm [shape: f32[2,8,256], index: 0, kind: input, shape index: {}]
  %s1 = inlined_call_operand.vmem [shape: f32[8,2], index: 1, kind: input, shape index: {}]
  %s2 = inlined_call_operand.vmem [shape: f32[1,2], index: 2, kind: input, shape index: {}]
  %s3 = inlined_call_operand.vmem [shape: f32[2,8], index: 3, kind: input, shape index: {}]
  %s4 = inlined_call_operand.vmem [shape: f32[1,8], index: 4, kind: input, shape index: {}]
  %s5 = inlined_call_operand.hbm [shape: f32[2,8,256], index: 5, kind: output, shape index: {}]
  %s6 = sld [smem:[#allocation0]]
  $region57: #{tpu_custom_call.1} parent=0
    _
  %s8 = ssub.s32 1, %s6
  %s9 = scalar_select 0, %s8, %s6
  $region1: #{tpu_custom_call.1} parent=0
    #allocation2 [shape = 'u8[16384]{0}', space=vmem, size = 0x4000, scoped, tag = 'input window, operand 0']
    #allocation3 [shape = 's32[2]{0}', space=sflag, size = 0x8, scoped, tag = 'scoped memory for tpu_custom_call.1']
    #allocation4 [shape = 's32[2]{0}', space=sflag, size = 0x8, scoped, tag = 'scoped memory for tpu_custom_call.1']
    #allocation5 [shape = 'u8[16384]{0}', space=vmem, size = 0x4000, scoped, tag = 'output window, operand 0']
    %10 = vsyncpa [#allocation3], 0
    %s11 = scalar_lea.sflag [#allocation3], 1
    %12 = vsyncpa %s11, 0
    %13 = vsyncpa [#allocation4], 0
    %s14 = scalar_lea.sflag [#allocation4], 1
    %15 = vsyncpa %s14, 0
    loop: start=0, step=1, limit=4
    $region2: #{tpu_custom_call.1} parent=1 // loop_pre_header
      _
    $region3: #{tpu_custom_call.1} parent=1 // loop_header
      %s17 = sphi 0, %s21
      %p18 = scmp.ge.s32.totalorder %s17, 4
      %s27 = sphi 0, %s29
      %s30 = sphi 0, %s27
      %s31 = sphi 0, %s30
      %s47 = sphi 0, %s31
      %s51 = sphi 0, %s51
      %s53 = sphi 0, %s51
      %s54 = sphi 0, %s53
      %s68 = sphi 0, %s54
      %s72 = sphi 0, %s72
      %s74 = sphi 0, %s72
      %s75 = sphi 0, %s74
      %s89 = sphi 0, %s75
      %s93 = sphi 0, %s93
      %s95 = sphi 0, %s93
      %s96 = sphi 0, %s95
      %s110 = sphi 0, %s96
      %s114 = sphi 0, %s114
      %s116 = sphi 0, %s114
      %s117 = sphi 0, %s116
      %s131 = sphi 0, %s117
      %s137 = sphi 0, %s139
      %s140 = sphi 0, %s137
      %s141 = sphi 0, %s140
      %s157 = sphi 0, %s141
    $region4: #{tpu_custom_call.1} parent=1 // loop_header_branch
      %20 = sbr.rel (%p18) target = $region8
    $region5: #{tpu_custom_call.1} parent=1 // loop_body
      %s22 = ssub.s32 %s17, 1
      %s23 = ssub.s32 %s17, 2
      %s24 = sadd.s32 %s17, 1
      %s25 = ssub.s32 %s17, %s24
      %p26 = scmp.eq.s32.totalorder %s25, 0
      %s28 = sadd.s32 %s27, 1
      %s29 = scalar_select %p26, %s27, %s28
      %p32 = pneg %p26
      %p33 = scmp.eq.s32.totalorder %s17, 1
      %p34 = por %p32, %p33
      %p35 = scmp.ne.s32.totalorder %s27, %s30
      %p36 = scmp.eq.s32.totalorder %s17, 0
      %p37 = por %p35, %p36
      %p38 = scmp.ne.s32.totalorder %s27, %s30
      %p39 = scmp.eq.s32.totalorder %s22, 1
      %p40 = por %p38, %p39
      %p41 = scmp.ne.s32.totalorder %s30, %s31
      %p42 = scmp.eq.s32.totalorder %s22, 0
      %p43 = por %p41, %p42
      %p44 = scmp.ne.s32.totalorder %s30, %s31
      %p45 = scmp.eq.s32.totalorder %s23, 1
      %p46 = por %p44, %p45
      %p48 = scmp.ne.s32.totalorder %s31, %s47
      %p49 = scmp.eq.s32.totalorder %s23, 0
      %p50 = por %p48, %p49
      %s52 = sadd.s32 %s51, 1
      %p55 = scmp.eq.s32.totalorder %s17, 1
      %p56 = scmp.ne.s32.totalorder %s51, %s53
      %p57 = scmp.eq.s32.totalorder %s17, 0
      %p58 = por %p56, %p57
      %p59 = scmp.ne.s32.totalorder %s51, %s53
      %p60 = scmp.eq.s32.totalorder %s22, 1
      %p61 = por %p59, %p60
      %p62 = scmp.ne.s32.totalorder %s53, %s54
      %p63 = scmp.eq.s32.totalorder %s22, 0
      %p64 = por %p62, %p63
      %p65 = scmp.ne.s32.totalorder %s53, %s54
      %p66 = scmp.eq.s32.totalorder %s23, 1
      %p67 = por %p65, %p66
      %p69 = scmp.ne.s32.totalorder %s54, %s68
      %p70 = scmp.eq.s32.totalorder %s23, 0
      %p71 = por %p69, %p70
      %s73 = sadd.s32 %s72, 1
      %p76 = scmp.eq.s32.totalorder %s17, 1
      %p77 = scmp.ne.s32.totalorder %s72, %s74
      %p78 = scmp.eq.s32.totalorder %s17, 0
      %p79 = por %p77, %p78
      %p80 = scmp.ne.s32.totalorder %s72, %s74
      %p81 = scmp.eq.s32.totalorder %s22, 1
      %p82 = por %p80, %p81
      %p83 = scmp.ne.s32.totalorder %s74, %s75
      %p84 = scmp.eq.s32.totalorder %s22, 0
      %p85 = por %p83, %p84
      %p86 = scmp.ne.s32.totalorder %s74, %s75
      %p87 = scmp.eq.s32.totalorder %s23, 1
      %p88 = por %p86, %p87
      %p90 = scmp.ne.s32.totalorder %s75, %s89
      %p91 = scmp.eq.s32.totalorder %s23, 0
      %p92 = por %p90, %p91
      %s94 = sadd.s32 %s93, 1
      %p97 = scmp.eq.s32.totalorder %s17, 1
      %p98 = scmp.ne.s32.totalorder %s93, %s95
      %p99 = scmp.eq.s32.totalorder %s17, 0
      %p100 = por %p98, %p99
      %p101 = scmp.ne.s32.totalorder %s93, %s95
      %p102 = scmp.eq.s32.totalorder %s22, 1
      %p103 = por %p101, %p102
      %p104 = scmp.ne.s32.totalorder %s95, %s96
      %p105 = scmp.eq.s32.totalorder %s22, 0
      %p106 = por %p104, %p105
      %p107 = scmp.ne.s32.totalorder %s95, %s96
      %p108 = scmp.eq.s32.totalorder %s23, 1
      %p109 = por %p107, %p108
      %p111 = scmp.ne.s32.totalorder %s96, %s110
      %p112 = scmp.eq.s32.totalorder %s23, 0
      %p113 = por %p111, %p112
      %s115 = sadd.s32 %s114, 1
      %p118 = scmp.eq.s32.totalorder %s17, 1
      %p119 = scmp.ne.s32.totalorder %s114, %s116
      %p120 = scmp.eq.s32.totalorder %s17, 0
      %p121 = por %p119, %p120
      %p122 = scmp.ne.s32.totalorder %s114, %s116
      %p123 = scmp.eq.s32.totalorder %s22, 1
      %p124 = por %p122, %p123
      %p125 = scmp.ne.s32.totalorder %s116, %s117
      %p126 = scmp.eq.s32.totalorder %s22, 0
      %p127 = por %p125, %p126
      %p128 = scmp.ne.s32.totalorder %s116, %s117
      %p129 = scmp.eq.s32.totalorder %s23, 1
      %p130 = por %p128, %p129
      %p132 = scmp.ne.s32.totalorder %s117, %s131
      %p133 = scmp.eq.s32.totalorder %s23, 0
      %p134 = por %p132, %p133
      %s135 = ssub.s32 %s17, %s24
      %p136 = scmp.eq.s32.totalorder %s135, 0
      %s138 = sadd.s32 %s137, 1
      %s139 = scalar_select %p136, %s137, %s138
      %p142 = pneg %p136
      %p143 = scmp.eq.s32.totalorder %s17, 1
      %p144 = por %p142, %p143
      %p145 = scmp.ne.s32.totalorder %s137, %s140
      %p146 = scmp.eq.s32.totalorder %s17, 0
      %p147 = por %p145, %p146
      %p148 = scmp.ne.s32.totalorder %s137, %s140
      %p149 = scmp.eq.s32.totalorder %s22, 1
      %p150 = por %p148, %p149
      %p151 = scmp.ne.s32.totalorder %s140, %s141
      %p152 = scmp.eq.s32.totalorder %s22, 0
      %p153 = por %p151, %p152
      %p154 = scmp.ne.s32.totalorder %s140, %s141
      %p155 = scmp.eq.s32.totalorder %s23, 1
      %p156 = por %p154, %p155
      %p158 = scmp.ne.s32.totalorder %s141, %s157
      %p159 = scmp.eq.s32.totalorder %s23, 0
      %p160 = por %p158, %p159
      %p161 = scmp.le.s32.totalorder 1, %s17
      %p162 = scmp.lt.s32.totalorder %s17, 3
      %p163 = pnand %p161, %p162
      %p164 = pneg %p163
      // Predicated region
      $region9: #{tpu_custom_call.1} parent=5 // pred_check
        _
      $region10: #{tpu_custom_call.1} parent=5 // pred_check_branch
        %166 = sbr.rel (%p163) target = $region12
      $region11: #{tpu_custom_call.1} parent=5 // pred_region
        %s167 = ssub.s32 %s17, 1
        // Predicated region
        $region13: #{tpu_custom_call.1} parent=11 // pred_check
          %p168 = pneg %p64
        $region14: #{tpu_custom_call.1} parent=11 // pred_check_branch
          %170 = sbr.rel (%p168) target = $region16
        $region15: #{tpu_custom_call.1} parent=11 // pred_region
          _
        $region16: #{tpu_custom_call.1} parent=11 // pred_fallthru
          _
        // Predicated region
        $region17: #{tpu_custom_call.1} parent=11 // pred_check
          %p171 = pneg %p85
        $region18: #{tpu_custom_call.1} parent=11 // pred_check_branch
          %173 = sbr.rel (%p171) target = $region20
        $region19: #{tpu_custom_call.1} parent=11 // pred_region
          _
        $region20: #{tpu_custom_call.1} parent=11 // pred_fallthru
          _
        // Predicated region
        $region21: #{tpu_custom_call.1} parent=11 // pred_check
          %p174 = pneg %p106
        $region22: #{tpu_custom_call.1} parent=11 // pred_check_branch
          %176 = sbr.rel (%p174) target = $region24
        $region23: #{tpu_custom_call.1} parent=11 // pred_region
          _
        $region24: #{tpu_custom_call.1} parent=11 // pred_fallthru
          _
        // Predicated region
        $region25: #{tpu_custom_call.1} parent=11 // pred_check
          %p177 = pneg %p127
        $region26: #{tpu_custom_call.1} parent=11 // pred_check_branch
          %179 = sbr.rel (%p177) target = $region28
        $region27: #{tpu_custom_call.1} parent=11 // pred_region
          _
        $region28: #{tpu_custom_call.1} parent=11 // pred_fallthru
          _
      $region12: #{tpu_custom_call.1} parent=5 // pred_fallthru
        _
      %p180 = scmp.lt.s32.totalorder %s17, 2
      // Predicated region
      $region29: #{tpu_custom_call.1} parent=5 // pred_check
        %p181 = pneg %p180
      $region30: #{tpu_custom_call.1} parent=5 // pred_check_branch
        %183 = sbr.rel (%p181) target = $region32
      $region31: #{tpu_custom_call.1} parent=5 // pred_region
        // Predicated region
        $region33: #{tpu_custom_call.1} parent=31 // pred_check
          %p184 = pneg %p37
        $region34: #{tpu_custom_call.1} parent=31 // pred_check_branch
          %186 = sbr.rel (%p184) target = $region36
        $region35: #{tpu_custom_call.1} parent=31 // pred_region
          %s187 = sand.u32 %s27, 1
          %s188 = scalar_lea.sflag [#allocation3], %s187
          %s189 = sand.u32 %s27, 1
          %s190 = smul.addr %s189, 16
          %s191 = scalar_lea.vmem [#allocation2], %s190
          %s193 = ssub.s32 256, 256
          %194 = vsyncadd %s188, %s193
          %s195 = smul.addr %s17, 2
          %s196 = smul.addr %s195, 128
          %s197 = scalar_lea.hbm %s0, %s196
          %s199 = sshll.u32 %s191, 4
          %s200 = int_to_ptr.vmem [resolvable:$true] %s199
          %202 = dma.hbm_to_vmem [thread:$0]  %s197, 256, %s200, %s188
        $region36: #{tpu_custom_call.1} parent=31 // pred_fallthru
          _
      $region32: #{tpu_custom_call.1} parent=5 // pred_fallthru
        _
      %p203 = scmp.le.s32.totalorder 1, %s17
      %p204 = scmp.lt.s32.totalorder %s17, 3
      %p205 = pnand %p203, %p204
      %p206 = pneg %p205
      // Predicated region
      $region37: #{tpu_custom_call.1} parent=5 // pred_check
        _
      $region38: #{tpu_custom_call.1} parent=5 // pred_check_branch
        %208 = sbr.rel (%p205) target = $region40
      $region39: #{tpu_custom_call.1} parent=5 // pred_region
        %s209 = ssub.s32 %s17, 1
        %s210 = sand.u32 %s30, 1
        %s211 = scalar_lea.sflag [#allocation3], %s210
        %s212 = sand.u32 %s30, 1
        %s213 = smul.addr %s212, 16
        %s214 = scalar_lea.vmem [#allocation2], %s213
        // Predicated region
        $region41: #{tpu_custom_call.1} parent=39 // pred_check
          %p215 = pneg %p43
        $region42: #{tpu_custom_call.1} parent=39 // pred_check_branch
          %217 = sbr.rel (%p215) target = $region44
        $region43: #{tpu_custom_call.1} parent=39 // pred_region
          %218 = dma.done %s211, 256
        $region44: #{tpu_custom_call.1} parent=39 // pred_fallthru
          _
        %s219 = sand.u32 %s30, 1
        %s220 = scalar_lea.sflag [#allocation3], %s219
        %s221 = sand.u32 %s30, 1
        %s222 = smul.addr %s221, 16
        %s223 = scalar_lea.vmem [#allocation2], %s222
        %p224 = pneg %p43
        %p225 = pneg %p40
        %p226 = pneg %p64
        %p227 = pneg %p61
        %p228 = pneg %p85
        %p229 = pneg %p82
        %p230 = pneg %p106
        %p231 = pneg %p103
        %p232 = pneg %p127
        %p233 = pneg %p124
        %p234 = pneg %p153
        %p235 = pneg %p150
        %s236 = sand.u32 %s140, 1
        %s237 = scalar_lea.sflag [#allocation4], %s236
        %s238 = sand.u32 %s140, 1
        %s239 = smul.addr %s238, 16
        %s240 = scalar_lea.vmem [#allocation5], %s239
        %v241 = vld [vmem:[%s214] sm:$0xff]
        %v242 = vld [vmem:[%s214 + $0x8] sm:$0xff]
        %v243 = vadd.f32 %v241, 0.0
        %v244 = vadd.f32 %v242, 0.0
        %v245 = vadd.f32 %v243, %v244
        %246 = vadd.xlane.f32.xlu0 %v245
        %v247 = vpop.xlane.xlu0 %246
        %v248 = vmul.f32 %v247, 0.00390625
        %v249 = vld [vmem:[%s1] sm:$0xff]
        %v250 = vld [vmem:[%s3] sm:$0x3]
        %v251 = vld [vmem:[%s2] sm:$0x1]
        %v252 = vld [vmem:[%s4] sm:$0x1]
        %v254 = vlaneseq
        %v255 = vand.u32 %v254, 127
        %v256 = vlaneseq
        %v257 = vshrl.u32 %v256, 7
        %v258 = vsub.s32 %v255, %v257
        %v259 = vrot.slane %v248, %v258
        %vm260 = vcmask 64512
        %v261 = vsel %vm260, %v259, 0
        %263 = vmatprep.subr.mxu0 0.0
        %264 = vmatpush1.msra.mxu0 %v249
        %265 = vmatprep.subr.mxu0 0.0
        %266 = vmatpush1.msra.mxu0 0.0
        %267 = vmatprep.subr.mxu0 0.0
        %268 = vmatpush1.msra.mxu0 0.0
        %269 = vmatprep.subr.mxu0 0.0
        %270 = vmatpush1.msra.mxu0 0.0
        %271 = vmatprep.subr.mxu0 0.0
        %272 = vmatpush1.msra.mxu0 0.0
        %273 = vmatprep.subr.mxu0 0.0
        %274 = vmatpush1.msra.mxu0 0.0
        %275 = vmatprep.subr.mxu0 0.0
        %276 = vmatpush1.msra.mxu0 0.0
        %277 = vmatprep.subr.mxu0 0.0
        %278 = vmatpush1.msra.mxu0 0.0
        %279 = vmatprep.subr.mxu0 0.0
        %280 = vmatpush1.msra.mxu0 0.0
        %281 = vmatprep.subr.mxu0 0.0
        %282 = vmatpush1.msra.mxu0 0.0
        %283 = vmatprep.subr.mxu0 0.0
        %284 = vmatpush1.msra.mxu0 0.0
        %285 = vmatprep.subr.mxu0 0.0
        %286 = vmatpush1.msra.mxu0 0.0
        %287 = vmatprep.subr.mxu0 0.0
        %288 = vmatpush1.msra.mxu0 0.0
        %289 = vmatprep.subr.mxu0 0.0
        %290 = vmatpush1.msra.mxu0 0.0
        %291 = vmatprep.subr.mxu0 0.0
        %292 = vmatpush1.msra.mxu0 0.0
        %293 = vmatprep.subr.mxu0 0.0
        %294 = vmatpush1.msra.mxu0 0.0
        %295 = vmatprep.subr.mxu0 0.0
        %296 = vmatpush1.msra.mxu0 0.0
        %297 = vmatprep.subr.mxu0 0.0
        %298 = vmatpush1.msra.mxu0 0.0
        %299 = vmatprep.subr.mxu0 0.0
        %300 = vmatpush1.msra.mxu0 0.0
        %301 = vmatprep.subr.mxu0 0.0
        %302 = vmatpush1.msra.mxu0 0.0
        %303 = vmatprep.subr.mxu0 0.0
        %304 = vmatpush1.msra.mxu0 0.0
        %305 = vmatprep.subr.mxu0 0.0
        %306 = vmatpush1.msra.mxu0 0.0
        %307 = vmatprep.subr.mxu0 0.0
        %308 = vmatpush1.msra.mxu0 0.0
        %309 = vmatprep.subr.mxu0 0.0
        %310 = vmatpush1.msra.mxu0 0.0
        %311 = vmatprep.subr.mxu0 0.0
        %312 = vmatpush1.msra.mxu0 0.0
        %313 = vmatprep.subr.mxu0 0.0
        %314 = vmatpush1.msra.mxu0 0.0
        %315 = vmatprep.subr.mxu0 0.0
        %316 = vmatpush1.msra.mxu0 0.0
        %317 = vmatprep.subr.mxu0 0.0
        %318 = vmatpush1.msra.mxu0 0.0
        %319 = vmatprep.subr.mxu0 0.0
        %320 = vmatpush1.msra.mxu0 0.0
        %321 = vmatprep.subr.mxu0 0.0
        %322 = vmatpush1.msra.mxu0 0.0
        %323 = vmatprep.subr.mxu0 0.0
        %324 = vmatpush1.msra.mxu0 0.0
        %325 = vmatprep.subr.mxu0 0.0
        %326 = vmatpush1.msra.mxu0 0.0
        %327 = vmatprep.mubr.f32.mxu0 0.0
        %328 = vmatmul.mubr.f32.gmra.mrb[0].mxu0 %v261
        %v329 = vpop.f32.mrb[0].mxu0
        %v330 = vadd.f32 %v251, %v329
        %v331 = vpop.f32.mrb[0].mxu0
        %332 = vdwg.mxu0
        %v333 = vmax.f32 %v330, 0.0
        %vm334 = vcmask 15360
        %v336 = vsel %vm334, %v333, 0
        %vm338 = vcmask 1041408
        %v340 = vsel %vm338, %v250, 0
        %342 = vmatprep.subr.mxu0 0.0
        %343 = vmatpush1.msra.mxu0 %v340
        %344 = vmatprep.subr.mxu0 0.0
        %345 = vmatpush1.msra.mxu0 0.0
        %346 = vmatprep.subr.mxu0 0.0
        %347 = vmatpush1.msra.mxu0 0.0
        %348 = vmatprep.subr.mxu0 0.0
        %349 = vmatpush1.msra.mxu0 0.0
        %350 = vmatprep.subr.mxu0 0.0
        %351 = vmatpush1.msra.mxu0 0.0
        %352 = vmatprep.subr.mxu0 0.0
        %353 = vmatpush1.msra.mxu0 0.0
        %354 = vmatprep.subr.mxu0 0.0
        %355 = vmatpush1.msra.mxu0 0.0
        %356 = vmatprep.subr.mxu0 0.0
        %357 = vmatpush1.msra.mxu0 0.0
        %358 = vmatprep.subr.mxu0 0.0
        %359 = vmatpush1.msra.mxu0 0.0
        %360 = vmatprep.subr.mxu0 0.0
        %361 = vmatpush1.msra.mxu0 0.0
        %362 = vmatprep.subr.mxu0 0.0
        %363 = vmatpush1.msra.mxu0 0.0
        %364 = vmatprep.subr.mxu0 0.0
        %365 = vmatpush1.msra.mxu0 0.0
        %366 = vmatprep.subr.mxu0 0.0
        %367 = vmatpush1.msra.mxu0 0.0
        %368 = vmatprep.subr.mxu0 0.0
        %369 = vmatpush1.msra.mxu0 0.0
        %370 = vmatprep.subr.mxu0 0.0
        %371 = vmatpush1.msra.mxu0 0.0
        %372 = vmatprep.subr.mxu0 0.0
        %373 = vmatpush1.msra.mxu0 0.0
        %374 = vmatprep.subr.mxu0 0.0
        %375 = vmatpush1.msra.mxu0 0.0
        %376 = vmatprep.subr.mxu0 0.0
        %377 = vmatpush1.msra.mxu0 0.0
        %378 = vmatprep.subr.mxu0 0.0
        %379 = vmatpush1.msra.mxu0 0.0
        %380 = vmatprep.subr.mxu0 0.0
        %381 = vmatpush1.msra.mxu0 0.0
        %382 = vmatprep.subr.mxu0 0.0
        %383 = vmatpush1.msra.mxu0 0.0
        %384 = vmatprep.subr.mxu0 0.0
        %385 = vmatpush1.msra.mxu0 0.0
        %386 = vmatprep.subr.mxu0 0.0
        %387 = vmatpush1.msra.mxu0 0.0
        %388 = vmatprep.subr.mxu0 0.0
        %389 = vmatpush1.msra.mxu0 0.0
        %390 = vmatprep.subr.mxu0 0.0
        %391 = vmatpush1.msra.mxu0 0.0
        %392 = vmatprep.subr.mxu0 0.0
        %393 = vmatpush1.msra.mxu0 0.0
        %394 = vmatprep.subr.mxu0 0.0
        %395 = vmatpush1.msra.mxu0 0.0
        %396 = vmatprep.subr.mxu0 0.0
        %397 = vmatpush1.msra.mxu0 0.0
        %398 = vmatprep.subr.mxu0 0.0
        %399 = vmatpush1.msra.mxu0 0.0
        %400 = vmatprep.subr.mxu0 0.0
        %401 = vmatpush1.msra.mxu0 0.0
        %402 = vmatprep.subr.mxu0 0.0
        %403 = vmatpush1.msra.mxu0 0.0
        %404 = vmatprep.subr.mxu0 0.0
        %405 = vmatpush1.msra.mxu0 0.0
        %406 = vmatprep.mubr.f32.mxu0 0.0
        %407 = vmatmul.mubr.f32.gmra.mrb[0].mxu0 %v336
        %v408 = vpop.f32.mrb[0].mxu0
        %v409 = vadd.f32 %v252, %v408
        %v410 = vpop.f32.mrb[0].mxu0
        %411 = vdwg.mxu0
        %v412 = vxor.u32 %v409, 2147483648
        %v413 = vmul.f32 %v412, 1.442695
        %v414 = vpow.pop %v413
        %v415 = vadd.f32 %v414, 1.0
        %v416 = vrcp.pop %v415
        %v417 = vmul.f32 1.0, %v416
        %v418 = vlaneseq
        %v419 = vshrl.u32 %v418, 7
        %v420 = vsub.s32 0, %v419
        %v421 = vrot.slane %v417, %v420
        %423 = vbcast.lane.b32.xlu0 %v421, 256
        %v424 = vpop.permute.xlu0 %423
        %v425 = vmul.f32 %v241, %v424
        %v426 = vmul.f32 %v242, %v424
        %427 = vst [vmem:[%s240] sm:$0xff] %v425
        %428 = vst [vmem:[%s240 + $0x8] sm:$0xff] %v426
        %s429 = sand.u32 %s140, 1
        %s430 = scalar_lea.sflag [#allocation4], %s429
        %s431 = sand.u32 %s140, 1
        %s432 = smul.addr %s431, 16
        %s433 = scalar_lea.vmem [#allocation5], %s432
        // Predicated region
        $region45: #{tpu_custom_call.1} parent=39 // pred_check
          %p434 = pneg %p150
        $region46: #{tpu_custom_call.1} parent=39 // pred_check_branch
          %436 = sbr.rel (%p434) target = $region48
        $region47: #{tpu_custom_call.1} parent=39 // pred_region
          %s438 = ssub.s32 256, 256
          %439 = vsyncadd %s430, %s438
          %s440 = smul.addr %s22, 2
          %s441 = smul.addr %s440, 128
          %s442 = scalar_lea.hbm %s5, %s441
          %s444 = sshll.u32 %s433, 4
          %s445 = int_to_ptr.vmem [resolvable:$true] %s444
          %447 = dma.vmem_to_hbm [thread:$0]  %s445, 256, %s442, %s430
        $region48: #{tpu_custom_call.1} parent=39 // pred_fallthru
          _
      $region40: #{tpu_custom_call.1} parent=5 // pred_fallthru
        _
      %p448 = scmp.le.s32.totalorder 2, %s17
      // Predicated region
      $region49: #{tpu_custom_call.1} parent=5 // pred_check
        %p449 = pneg %p448
      $region50: #{tpu_custom_call.1} parent=5 // pred_check_branch
        %451 = sbr.rel (%p449) target = $region52
      $region51: #{tpu_custom_call.1} parent=5 // pred_region
        %s452 = ssub.s32 %s17, 2
        // Predicated region
        $region53: #{tpu_custom_call.1} parent=51 // pred_check
          %p453 = pneg %p156
        $region54: #{tpu_custom_call.1} parent=51 // pred_check_branch
          %455 = sbr.rel (%p453) target = $region56
        $region55: #{tpu_custom_call.1} parent=51 // pred_region
          %s456 = sand.u32 %s141, 1
          %s457 = scalar_lea.sflag [#allocation4], %s456
          %s458 = sand.u32 %s141, 1
          %s459 = smul.addr %s458, 16
          %s460 = scalar_lea.vmem [#allocation5], %s459
          %461 = dma.done %s457, 256
        $region56: #{tpu_custom_call.1} parent=51 // pred_fallthru
          _
      $region52: #{tpu_custom_call.1} parent=5 // pred_fallthru
        _
    $region6: #{tpu_custom_call.1} parent=1 // loop_footer
      %s21 = sadd.s32 1, %s17
    $region7: #{tpu_custom_call.1} parent=1 // loop_footer_branch
      %16 = sbr.rel target = $region3
    $region8: #{tpu_custom_call.1} parent=1 // loop_exit
      _
    %462 = vsyncpa [#allocation3], 1
    %s463 = scalar_lea.sflag [#allocation3], 1
    %464 = vsyncpa %s463, 1
    %465 = vsyncpa [#allocation4], 1
    %s466 = scalar_lea.sflag [#allocation4], 1
    %467 = vsyncpa %s466, 1

</llo_original>
